<compile_context>
chip_gen: v6e
topology: v6e:2x2x1
jax: 0.10.0
libtpu: 0.0.40
codegen_flags: <defaults>
</compile_context>

<pallas_src>
import jax
import jax.numpy as jnp
from jax.experimental import pallas as pl
from jax.experimental.pallas import tpu as pltpu


# Resident-buffer budget assumed by the block chooser (z double buffer, out/beta
# double buffers, f32 temps).  Conservative enough for every generation
# (v7x: 64 MiB physical VMEM); the scoped limit below is raised to match.
_VMEM_RESIDENT_BUDGET_BYTES = 28 * 1024 * 1024
_VMEM_LIMIT_BYTES = 40 * 1024 * 1024


def attention_kernel(z_ref, w1_ref, b1_ref, w2_ref, out_ref, beta_ref):
    # z_ref   : (TB, N, D)  batch-block of inputs (streamed / double-buffered)
    # w1_ref  : (D, H)      first Linear weight  (VMEM resident)
    # b1_ref  : (1, H)      first Linear bias    (VMEM resident)
    # w2_ref  : (1, H)      second Linear weight as a row (VMEM resident)
    # out_ref : (TB, D)     pooled output block
    # beta_ref: (TB, N)     attention weights, lane-dense (N on lanes)
    z = z_ref[...]                                               # (TB, N, D)

    # --- projection on the MXU, f32 accumulation, no relayout reshapes ---
    h = jnp.tanh(
        jnp.einsum("bnd,dh->bnh", z, w1_ref[...],
                   preferred_element_type=jnp.float32)
        + b1_ref[...].reshape(1, 1, -1)
    )                                                            # (TB, N, H) f32

    # --- Linear(H -> 1, no bias): VPU multiply + lane reduce (no N=1 matmul) ---
    logits = jnp.sum(h * w2_ref[...].reshape(1, 1, -1), axis=-1)  # (TB, N) f32

    # --- numerically-stable softmax over the sequence (lane) axis, exact div ---
    m = jnp.max(logits, axis=-1, keepdims=True)                  # (TB, 1)
    e = jnp.exp(logits - m)                                      # (TB, N)
    beta = e / jnp.sum(e, axis=-1, keepdims=True)                # (TB, N) f32

    beta_ref[...] = beta.astype(beta_ref.dtype)                  # lane-dense store

    # --- weighted pooling: VPU multiply + sublane reduce, f32 accumulation ---
    pooled = jnp.sum(beta[:, :, None] * z.astype(jnp.float32), axis=1)  # (TB, D)
    out_ref[...] = pooled.astype(out_ref.dtype)


def _choose_batch_block(B, N, D, H, itemsize,
                        target_z_block_bytes=4 * 1024 * 1024,
                        vmem_budget_bytes=_VMEM_RESIDENT_BUDGET_BYTES,
                        min_grid_steps=4):
    """Pick the batch block TB.

    Policy (per review):
      * size by target z-block bytes (~2-8 MiB) so the mem-bound pipeline runs
        near the HBM roofline and the ~0.35us/step overhead is amortized,
      * cap by the total resident-VMEM footprint (2x z, 2x out, 2x beta,
        f32 temps), not just the z double buffer,
      * keep >= min_grid_steps grid steps when B permits (v7x megacore),
      * never fall back to the whole batch; sublane-align TB to 8 and let the
        wrapper pad B up to grid*TB instead.
    """
    if B <= 8:
        return B  # tiny batch: single step, block covers the full batch dim

    per_tb_bytes = (2 * N * D * itemsize       # z double buffer
                    + 2 * D * itemsize         # out double buffer
                    + 2 * N * itemsize         # beta double buffer
                    + N * H * 4                # h f32 temp
                    + 4 * N * 4                # logits / e / softmax temps (f32)
                    + 2 * D * 4)               # pooled f32 temp
    per_tb_bytes = max(1, per_tb_bytes)

    # target block size in bytes
    tb = max(1, target_z_block_bytes // max(1, N * D * itemsize))
    # total resident footprint must fit the budget
    tb = min(tb, max(1, vmem_budget_bytes // per_tb_bytes))
    # keep several grid steps so pipelining + v7x's 2 TensorCores have work
    tb = min(tb, max(8, B // min_grid_steps))
    tb = min(tb, B)
    # sublane-align the 2-D output blocks (TB, D)/(TB, N)
    tb = max(8, (tb // 8) * 8)
    return tb


def attention_forward(z, w1, b1, w2):
    """z: (B, N, D); w1: (D, H); b1: (H,); w2: (H, 1).
    Returns ((B, D), (B, N, 1)) matching the PyTorch module's forward."""
    B, N, D = z.shape
    H = w1.shape[1]
    dtype = z.dtype

    # one common dtype into the MXU (avoids mixed-precision casts, esp. v5e)
    w1_c = w1.astype(dtype)
    b1_row = b1.reshape(1, H).astype(dtype)
    w2_row = w2.reshape(1, H).astype(dtype)

    TB = _choose_batch_block(B, N, D, H, dtype.itemsize)
    grid_len = pl.cdiv(B, TB)
    B_pad = grid_len * TB
    z_in = z if B_pad == B else jnp.pad(z, ((0, B_pad - B), (0, 0), (0, 0)))

    # advisory cost estimate so XLA schedules surrounding HLO around the call
    flops = (2 * B_pad * N * D * H      # projection matmul
             + 2 * B_pad * N * H        # logits multiply+reduce
             + 3 * B_pad * N * D)       # pooling multiply+reduce
    transcendentals = B_pad * N * H + B_pad * N     # tanh + exp
    bytes_accessed = (B_pad * N * D * dtype.itemsize          # z in
                      + B_pad * D * dtype.itemsize            # out
                      + B_pad * N * dtype.itemsize            # beta
                      + (D * H + 2 * H) * dtype.itemsize)     # weights

    out, beta = pl.pallas_call(
        attention_kernel,
        out_shape=(
            jax.ShapeDtypeStruct((B_pad, D), dtype),
            jax.ShapeDtypeStruct((B_pad, N), dtype),   # lane-dense beta
        ),
        grid_spec=pltpu.PrefetchScalarGridSpec(
            num_scalar_prefetch=0,
            grid=(grid_len,),
            in_specs=[
                # batch-blocked activations (streamed / double-buffered)
                pl.BlockSpec((TB, N, D), lambda b: (b, 0, 0)),
                # tiny weights: whole-array VMEM residents (no per-step DMA)
                pl.BlockSpec(memory_space=pltpu.MemorySpace.VMEM),
                pl.BlockSpec(memory_space=pltpu.MemorySpace.VMEM),
                pl.BlockSpec(memory_space=pltpu.MemorySpace.VMEM),
            ],
            out_specs=[
                pl.BlockSpec((TB, D), lambda b: (b, 0)),
                pl.BlockSpec((TB, N), lambda b: (b, 0)),
            ],
        ),
        compiler_params=pltpu.CompilerParams(
            dimension_semantics=("parallel",),   # batch blocks shard across TCs (v7x)
            vmem_limit_bytes=_VMEM_LIMIT_BYTES,  # matches the chooser's assumption
        ),
        cost_estimate=pl.CostEstimate(
            flops=flops,
            transcendentals=transcendentals,
            bytes_accessed=bytes_accessed,
        ),
    )(z_in, w1_c, b1_row, w2_row)

    if B_pad != B:
        out = out[:B]
        beta = beta[:B]

    # Caller-facing beta is (B, N, 1), same as the PyTorch module.
    return out, beta[..., None]


def attention_ref(z, w1, b1, w2):
    # pure-JAX reference of the PyTorch forward
    w = jnp.tanh(z @ w1 + b1) @ w2                # (B, N, 1)
    beta = jax.nn.softmax(w, axis=1)
    return (beta * z).sum(axis=1), beta


if __name__ == "__main__":
    key = jax.random.PRNGKey(0)
    B, N, D, H = 16, 8, 32, 16   # batch, seq, in_size, hidden_size

    k_z, k_w1, k_b1, k_w2 = jax.random.split(key, 4)
    z = jax.random.normal(k_z, (B, N, D), dtype=jnp.float32)
    # deterministic params (shapes match nn.Linear(D,H) and nn.Linear(H,1,bias=False))
    w1 = jax.random.uniform(k_w1, (D, H), minval=-1.0 / D**0.5, maxval=1.0 / D**0.5)
    b1 = jax.random.uniform(k_b1, (H,), minval=-1.0 / D**0.5, maxval=1.0 / D**0.5)
    w2 = jax.random.uniform(k_w2, (H, 1), minval=-1.0 / H**0.5, maxval=1.0 / H**0.5)

    out, beta = attention_forward(z, w1, b1, w2)
    jax.block_until_ready((out, beta))

    out_ref, beta_ref = attention_ref(z, w1, b1, w2)
    assert out.shape == (B, D) and beta.shape == (B, N, 1)
    # exact softmax division -> tight tolerances
    assert jnp.allclose(out, out_ref, atol=1e-5, rtol=1e-5)
    assert jnp.allclose(beta, beta_ref, atol=1e-5, rtol=1e-5)
    assert jnp.allclose(jnp.sum(beta[:, :, 0], axis=-1), 1.0, atol=1e-6)

    print("KERNEL_OK")
</pallas_src>

<mosaic_0001>
module attributes {stable_mosaic.version = 11 : i64} {
  func.func @attention_kernel(%arg0: i32, %arg1: memref<8x8x32xf32, #tpu.memory_space<vmem>>, %arg2: memref<32x16xf32, #tpu.memory_space<vmem>>, %arg3: memref<1x16xf32, #tpu.memory_space<vmem>>, %arg4: memref<1x16xf32, #tpu.memory_space<vmem>>, %arg5: memref<8x32xf32, #tpu.memory_space<vmem>>, %arg6: memref<8x8xf32, #tpu.memory_space<vmem>>) attributes {dimension_semantics = [#tpu.dimension_semantics<parallel>], iteration_bounds = array<i64: 2>, scalar_prefetch = 0 : i64, scratch_operands = 0 : i64, tpu.core_type = #tpu.core_type<tc>, window_params = [{transform_indices = @transform_0, window_bounds = array<i64: 8, 8, 32>}, {pipeline_mode = #tpu.pipeline_mode<synchronous>, transform_indices = @transform_1, window_bounds = array<i64: 32, 16>}, {pipeline_mode = #tpu.pipeline_mode<synchronous>, transform_indices = @transform_2, window_bounds = array<i64: 1, 16>}, {pipeline_mode = #tpu.pipeline_mode<synchronous>, transform_indices = @transform_3, window_bounds = array<i64: 1, 16>}, {transform_indices = @transform_4, window_bounds = array<i64: 8, 32>}, {transform_indices = @transform_5, window_bounds = array<i64: 8, 8>}]} {
    %c0 = arith.constant 0 : index
    %c0_0 = arith.constant 0 : index
    %c0_1 = arith.constant 0 : index
    %0 = vector.load %arg1[%c0, %c0_0, %c0_1] : memref<8x8x32xf32, #tpu.memory_space<vmem>>, vector<8x8x32xf32>
    %c0_2 = arith.constant 0 : index
    %c0_3 = arith.constant 0 : index
    %1 = vector.load %arg2[%c0_2, %c0_3] : memref<32x16xf32, #tpu.memory_space<vmem>>, vector<32x16xf32>
    "tpu.trace_start"() <{level = 10 : i32, message = "bnd,dh->bnh"}> : () -> ()
    %cst = arith.constant dense<0.000000e+00> : vector<8x8x16xf32>
    %2 = tpu.matmul %0, %1, %cst {dimension_numbers = #tpu.dot_dimension_numbers<[2], [0], [0, 1], [1], [0, 0, 0, 1, 1, 1], [], []>} : vector<8x8x32xf32>, vector<32x16xf32>, vector<8x8x16xf32> -> vector<8x8x16xf32>
    "tpu.trace_stop"() : () -> ()
    %c0_4 = arith.constant 0 : index
    %c0_5 = arith.constant 0 : index
    %3 = vector.load %arg3[%c0_4, %c0_5] : memref<1x16xf32, #tpu.memory_space<vmem>>, vector<1x16xf32>
    %4 = vector.shape_cast %3 : vector<1x16xf32> to vector<1x1x16xf32>
    %5 = vector.broadcast %4 : vector<1x1x16xf32> to vector<8x8x16xf32>
    %6 = arith.addf %2, %5 : vector<8x8x16xf32>
    %7 = math.tanh %6 : vector<8x8x16xf32>
    %c0_6 = arith.constant 0 : index
    %c0_7 = arith.constant 0 : index
    %8 = vector.load %arg4[%c0_6, %c0_7] : memref<1x16xf32, #tpu.memory_space<vmem>>, vector<1x16xf32>
    %9 = vector.shape_cast %8 : vector<1x16xf32> to vector<1x1x16xf32>
    %10 = vector.broadcast %9 : vector<1x1x16xf32> to vector<8x8x16xf32>
    %11 = arith.mulf %7, %10 : vector<8x8x16xf32>
    %cst_8 = arith.constant dense<0.000000e+00> : vector<8x8xf32>
    %12 = vector.multi_reduction <add>, %11, %cst_8 [2] : vector<8x8x16xf32> to vector<8x8xf32>
    %cst_9 = arith.constant dense<0xFF800000> : vector<8xf32>
    %13 = vector.multi_reduction <maximumf>, %12, %cst_9 [1] : vector<8x8xf32> to vector<8xf32>
    %14 = vector.shape_cast %13 : vector<8xf32> to vector<8x1xf32>
    %15 = vector.broadcast %14 : vector<8x1xf32> to vector<8x8xf32>
    %16 = arith.subf %12, %15 : vector<8x8xf32>
    %17 = math.exp %16 : vector<8x8xf32>
    %cst_10 = arith.constant dense<0.000000e+00> : vector<8xf32>
    %18 = vector.multi_reduction <add>, %17, %cst_10 [1] : vector<8x8xf32> to vector<8xf32>
    %19 = vector.shape_cast %18 : vector<8xf32> to vector<8x1xf32>
    %20 = vector.broadcast %19 : vector<8x1xf32> to vector<8x8xf32>
    %21 = arith.divf %17, %20 : vector<8x8xf32>
    %c0_11 = arith.constant 0 : index
    %c0_12 = arith.constant 0 : index
    %22 = vector.load %arg6[%c0_11, %c0_12] : memref<8x8xf32, #tpu.memory_space<vmem>>, vector<8x8xf32>
    tpu.vector_store %arg6[%c0_11, %c0_12], %21 {strides = array<i32>} : memref<8x8xf32, #tpu.memory_space<vmem>>, vector<8x8xf32>,
    %23 = vector.shape_cast %21 : vector<8x8xf32> to vector<8x8x1xf32>
    %24 = vector.broadcast %23 : vector<8x8x1xf32> to vector<8x8x32xf32>
    %25 = arith.mulf %24, %0 : vector<8x8x32xf32>
    %cst_13 = arith.constant dense<0.000000e+00> : vector<8x32xf32>
    %26 = vector.multi_reduction <add>, %25, %cst_13 [1] : vector<8x8x32xf32> to vector<8x32xf32>
    %c0_14 = arith.constant 0 : index
    %c0_15 = arith.constant 0 : index
    %27 = vector.load %arg5[%c0_14, %c0_15] : memref<8x32xf32, #tpu.memory_space<vmem>>, vector<8x32xf32>
    tpu.vector_store %arg5[%c0_14, %c0_15], %26 {strides = array<i32>} : memref<8x32xf32, #tpu.memory_space<vmem>>, vector<8x32xf32>,
    return
  }
  func.func @transform_0(%arg0: i32) -> (i32, i32, i32) {
    %c0_i32 = arith.constant 0 : i32
    %c0_i32_0 = arith.constant 0 : i32
    %c0_i32_1 = arith.constant 0 : i32
    return %arg0, %c0_i32, %c0_i32_0 : i32, i32, i32
  }
  func.func @transform_1(%arg0: i32) -> (i32, i32) {
    %c0_i32 = arith.constant 0 : i32
    %c0_i32_0 = arith.constant 0 : i32
    %c0_i32_1 = arith.constant 0 : i32
    return %c0_i32, %c0_i32_0 : i32, i32
  }
  func.func @transform_2(%arg0: i32) -> (i32, i32) {
    %c0_i32 = arith.constant 0 : i32
    %c0_i32_0 = arith.constant 0 : i32
    %c0_i32_1 = arith.constant 0 : i32
    return %c0_i32, %c0_i32_0 : i32, i32
  }
  func.func @transform_3(%arg0: i32) -> (i32, i32) {
    %c0_i32 = arith.constant 0 : i32
    %c0_i32_0 = arith.constant 0 : i32
    %c0_i32_1 = arith.constant 0 : i32
    return %c0_i32, %c0_i32_0 : i32, i32
  }
  func.func @transform_4(%arg0: i32) -> (i32, i32) {
    %c0_i32 = arith.constant 0 : i32
    %c0_i32_0 = arith.constant 0 : i32
    return %arg0, %c0_i32 : i32, i32
  }
  func.func @transform_5(%arg0: i32) -> (i32, i32) {
    %c0_i32 = arith.constant 0 : i32
    %c0_i32_0 = arith.constant 0 : i32
    return %arg0, %c0_i32 : i32, i32
  }
}

</mosaic_0001>

<llo_original>
// kernel: tpu_custom_call.1
$region0: #{tpu_custom_call.1}
  #allocation0 [shape = 'u32[]', space=smem, size = 0x4, offset = 0x4, fixed_abs, tag = 'smem constant byte address 0x4 - core index']
  #allocation1 [shape = 'u32[144,128]{1,0:T(1,128)}', space=vmem, size = 0x12000, scoped, tag = 'internal scratch']
  %s0 = inlined_call_operand.hbm [shape: f32[16,8,32], index: 0, kind: input, shape index: {}]
  %s1 = inlined_call_operand.vmem [shape: f32[32,16], index: 1, kind: input, shape index: {}]
  %s2 = inlined_call_operand.vmem [shape: f32[1,16], index: 2, kind: input, shape index: {}]
  %s3 = inlined_call_operand.vmem [shape: f32[1,16], index: 3, kind: input, shape index: {}]
  %s4 = inlined_call_operand.hbm [shape: f32[16,32], index: 4, kind: output, shape index: {0}]
  %s5 = inlined_call_operand.vmem [shape: f32[16,8], index: 5, kind: output, shape index: {1}]
  %6 = xla_tuple %s4, %s5
  %s7 = sld [smem:[#allocation0]]
  $region61: #{tpu_custom_call.1} parent=0
    _
  %s9 = ssub.s32 1, %s7
  %s10 = scalar_select 0, %s9, %s7
  $region1: #{tpu_custom_call.1} parent=0
    #allocation2 [shape = 'u8[65536]{0}', space=vmem, size = 0x10000, scoped, tag = 'input window, operand 0']
    #allocation3 [shape = 's32[2]{0}', space=sflag, size = 0x8, scoped, tag = 'scoped memory for tpu_custom_call.1']
    #allocation4 [shape = 's32[2]{0}', space=sflag, size = 0x8, scoped, tag = 'scoped memory for tpu_custom_call.1']
    #allocation5 [shape = 'u8[8192]{0}', space=vmem, size = 0x2000, scoped, tag = 'output window, operand 0']
    %11 = vsyncpa [#allocation3], 0
    %s12 = scalar_lea.sflag [#allocation3], 1
    %13 = vsyncpa %s12, 0
    %14 = vsyncpa [#allocation4], 0
    %s15 = scalar_lea.sflag [#allocation4], 1
    %16 = vsyncpa %s15, 0
    loop: start=0, step=1, limit=4
    $region2: #{tpu_custom_call.1} parent=1 // loop_pre_header
      _
    $region3: #{tpu_custom_call.1} parent=1 // loop_header
      %s18 = sphi 0, %s22
      %p19 = scmp.ge.s32.totalorder %s18, 4
      %s28 = sphi 0, %s30
      %s31 = sphi 0, %s28
      %s32 = sphi 0, %s31
      %s48 = sphi 0, %s32
      %s52 = sphi 0, %s52
      %s54 = sphi 0, %s52
      %s55 = sphi 0, %s54
      %s69 = sphi 0, %s55
      %s73 = sphi 0, %s73
      %s75 = sphi 0, %s73
      %s76 = sphi 0, %s75
      %s90 = sphi 0, %s76
      %s94 = sphi 0, %s94
      %s96 = sphi 0, %s94
      %s97 = sphi 0, %s96
      %s111 = sphi 0, %s97
      %s117 = sphi 0, %s119
      %s120 = sphi 0, %s117
      %s121 = sphi 0, %s120
      %s137 = sphi 0, %s121
      %s143 = sphi 0, %s145
      %s146 = sphi 0, %s143
      %s147 = sphi 0, %s146
      %s163 = sphi 0, %s147
    $region4: #{tpu_custom_call.1} parent=1 // loop_header_branch
      %21 = sbr.rel (%p19) target = $region8
    $region5: #{tpu_custom_call.1} parent=1 // loop_body
      %s23 = ssub.s32 %s18, 1
      %s24 = ssub.s32 %s18, 2
      %s25 = sadd.s32 %s18, 1
      %s26 = ssub.s32 %s18, %s25
      %p27 = scmp.eq.s32.totalorder %s26, 0
      %s29 = sadd.s32 %s28, 1
      %s30 = scalar_select %p27, %s28, %s29
      %p33 = pneg %p27
      %p34 = scmp.eq.s32.totalorder %s18, 1
      %p35 = por %p33, %p34
      %p36 = scmp.ne.s32.totalorder %s28, %s31
      %p37 = scmp.eq.s32.totalorder %s18, 0
      %p38 = por %p36, %p37
      %p39 = scmp.ne.s32.totalorder %s28, %s31
      %p40 = scmp.eq.s32.totalorder %s23, 1
      %p41 = por %p39, %p40
      %p42 = scmp.ne.s32.totalorder %s31, %s32
      %p43 = scmp.eq.s32.totalorder %s23, 0
      %p44 = por %p42, %p43
      %p45 = scmp.ne.s32.totalorder %s31, %s32
      %p46 = scmp.eq.s32.totalorder %s24, 1
      %p47 = por %p45, %p46
      %p49 = scmp.ne.s32.totalorder %s32, %s48
      %p50 = scmp.eq.s32.totalorder %s24, 0
      %p51 = por %p49, %p50
      %s53 = sadd.s32 %s52, 1
      %p56 = scmp.eq.s32.totalorder %s18, 1
      %p57 = scmp.ne.s32.totalorder %s52, %s54
      %p58 = scmp.eq.s32.totalorder %s18, 0
      %p59 = por %p57, %p58
      %p60 = scmp.ne.s32.totalorder %s52, %s54
      %p61 = scmp.eq.s32.totalorder %s23, 1
      %p62 = por %p60, %p61
      %p63 = scmp.ne.s32.totalorder %s54, %s55
      %p64 = scmp.eq.s32.totalorder %s23, 0
      %p65 = por %p63, %p64
      %p66 = scmp.ne.s32.totalorder %s54, %s55
      %p67 = scmp.eq.s32.totalorder %s24, 1
      %p68 = por %p66, %p67
      %p70 = scmp.ne.s32.totalorder %s55, %s69
      %p71 = scmp.eq.s32.totalorder %s24, 0
      %p72 = por %p70, %p71
      %s74 = sadd.s32 %s73, 1
      %p77 = scmp.eq.s32.totalorder %s18, 1
      %p78 = scmp.ne.s32.totalorder %s73, %s75
      %p79 = scmp.eq.s32.totalorder %s18, 0
      %p80 = por %p78, %p79
      %p81 = scmp.ne.s32.totalorder %s73, %s75
      %p82 = scmp.eq.s32.totalorder %s23, 1
      %p83 = por %p81, %p82
      %p84 = scmp.ne.s32.totalorder %s75, %s76
      %p85 = scmp.eq.s32.totalorder %s23, 0
      %p86 = por %p84, %p85
      %p87 = scmp.ne.s32.totalorder %s75, %s76
      %p88 = scmp.eq.s32.totalorder %s24, 1
      %p89 = por %p87, %p88
      %p91 = scmp.ne.s32.totalorder %s76, %s90
      %p92 = scmp.eq.s32.totalorder %s24, 0
      %p93 = por %p91, %p92
      %s95 = sadd.s32 %s94, 1
      %p98 = scmp.eq.s32.totalorder %s18, 1
      %p99 = scmp.ne.s32.totalorder %s94, %s96
      %p100 = scmp.eq.s32.totalorder %s18, 0
      %p101 = por %p99, %p100
      %p102 = scmp.ne.s32.totalorder %s94, %s96
      %p103 = scmp.eq.s32.totalorder %s23, 1
      %p104 = por %p102, %p103
      %p105 = scmp.ne.s32.totalorder %s96, %s97
      %p106 = scmp.eq.s32.totalorder %s23, 0
      %p107 = por %p105, %p106
      %p108 = scmp.ne.s32.totalorder %s96, %s97
      %p109 = scmp.eq.s32.totalorder %s24, 1
      %p110 = por %p108, %p109
      %p112 = scmp.ne.s32.totalorder %s97, %s111
      %p113 = scmp.eq.s32.totalorder %s24, 0
      %p114 = por %p112, %p113
      %s115 = ssub.s32 %s18, %s25
      %p116 = scmp.eq.s32.totalorder %s115, 0
      %s118 = sadd.s32 %s117, 1
      %s119 = scalar_select %p116, %s117, %s118
      %p122 = pneg %p116
      %p123 = scmp.eq.s32.totalorder %s18, 1
      %p124 = por %p122, %p123
      %p125 = scmp.ne.s32.totalorder %s117, %s120
      %p126 = scmp.eq.s32.totalorder %s18, 0
      %p127 = por %p125, %p126
      %p128 = scmp.ne.s32.totalorder %s117, %s120
      %p129 = scmp.eq.s32.totalorder %s23, 1
      %p130 = por %p128, %p129
      %p131 = scmp.ne.s32.totalorder %s120, %s121
      %p132 = scmp.eq.s32.totalorder %s23, 0
      %p133 = por %p131, %p132
      %p134 = scmp.ne.s32.totalorder %s120, %s121
      %p135 = scmp.eq.s32.totalorder %s24, 1
      %p136 = por %p134, %p135
      %p138 = scmp.ne.s32.totalorder %s121, %s137
      %p139 = scmp.eq.s32.totalorder %s24, 0
      %p140 = por %p138, %p139
      %s141 = ssub.s32 %s18, %s25
      %p142 = scmp.eq.s32.totalorder %s141, 0
      %s144 = sadd.s32 %s143, 1
      %s145 = scalar_select %p142, %s143, %s144
      %p148 = pneg %p142
      %p149 = scmp.eq.s32.totalorder %s18, 1
      %p150 = por %p148, %p149
      %p151 = scmp.ne.s32.totalorder %s143, %s146
      %p152 = scmp.eq.s32.totalorder %s18, 0
      %p153 = por %p151, %p152
      %p154 = scmp.ne.s32.totalorder %s143, %s146
      %p155 = scmp.eq.s32.totalorder %s23, 1
      %p156 = por %p154, %p155
      %p157 = scmp.ne.s32.totalorder %s146, %s147
      %p158 = scmp.eq.s32.totalorder %s23, 0
      %p159 = por %p157, %p158
      %p160 = scmp.ne.s32.totalorder %s146, %s147
      %p161 = scmp.eq.s32.totalorder %s24, 1
      %p162 = por %p160, %p161
      %p164 = scmp.ne.s32.totalorder %s147, %s163
      %p165 = scmp.eq.s32.totalorder %s24, 0
      %p166 = por %p164, %p165
      %p167 = scmp.le.s32.totalorder 1, %s18
      %p168 = scmp.lt.s32.totalorder %s18, 3
      %p169 = pnand %p167, %p168
      %p170 = pneg %p169
      // Predicated region
      $region9: #{tpu_custom_call.1} parent=5 // pred_check
        _
      $region10: #{tpu_custom_call.1} parent=5 // pred_check_branch
        %172 = sbr.rel (%p169) target = $region12
      $region11: #{tpu_custom_call.1} parent=5 // pred_region
        %s173 = ssub.s32 %s18, 1
        // Predicated region
        $region13: #{tpu_custom_call.1} parent=11 // pred_check
          %p174 = pneg %p65
        $region14: #{tpu_custom_call.1} parent=11 // pred_check_branch
          %176 = sbr.rel (%p174) target = $region16
        $region15: #{tpu_custom_call.1} parent=11 // pred_region
          _
        $region16: #{tpu_custom_call.1} parent=11 // pred_fallthru
          _
        // Predicated region
        $region17: #{tpu_custom_call.1} parent=11 // pred_check
          %p177 = pneg %p86
        $region18: #{tpu_custom_call.1} parent=11 // pred_check_branch
          %179 = sbr.rel (%p177) target = $region20
        $region19: #{tpu_custom_call.1} parent=11 // pred_region
          _
        $region20: #{tpu_custom_call.1} parent=11 // pred_fallthru
          _
        // Predicated region
        $region21: #{tpu_custom_call.1} parent=11 // pred_check
          %p180 = pneg %p107
        $region22: #{tpu_custom_call.1} parent=11 // pred_check_branch
          %182 = sbr.rel (%p180) target = $region24
        $region23: #{tpu_custom_call.1} parent=11 // pred_region
          _
        $region24: #{tpu_custom_call.1} parent=11 // pred_fallthru
          _
      $region12: #{tpu_custom_call.1} parent=5 // pred_fallthru
        _
      %p183 = scmp.lt.s32.totalorder %s18, 2
      // Predicated region
      $region25: #{tpu_custom_call.1} parent=5 // pred_check
        %p184 = pneg %p183
      $region26: #{tpu_custom_call.1} parent=5 // pred_check_branch
        %186 = sbr.rel (%p184) target = $region28
      $region27: #{tpu_custom_call.1} parent=5 // pred_region
        // Predicated region
        $region29: #{tpu_custom_call.1} parent=27 // pred_check
          %p187 = pneg %p38
        $region30: #{tpu_custom_call.1} parent=27 // pred_check_branch
          %189 = sbr.rel (%p187) target = $region32
        $region31: #{tpu_custom_call.1} parent=27 // pred_region
          %s190 = sand.u32 %s28, 1
          %s191 = scalar_lea.sflag [#allocation3], %s190
          %s192 = sand.u32 %s28, 1
          %s193 = smul.addr %s192, 64
          %s194 = scalar_lea.vmem [#allocation2], %s193
          %s195 = smul.u32 8, %s18
          %s197 = ssub.s32 1024, 1024
          %198 = vsyncadd %s191, %s197
          %s199 = smul.addr %s195, 128
          %s200 = scalar_lea.hbm %s0, %s199
          %s201 = sshll.u32 %s194, 4
          %s202 = int_to_ptr.vmem [resolvable:$true] %s201
          %207 = dma.hbm_to_vmem [thread:$0]  %s200, 1024, %s202, %s191, 128, 128, 8
        $region32: #{tpu_custom_call.1} parent=27 // pred_fallthru
          _
      $region28: #{tpu_custom_call.1} parent=5 // pred_fallthru
        _
      %p208 = scmp.le.s32.totalorder 1, %s18
      %p209 = scmp.lt.s32.totalorder %s18, 3
      %p210 = pnand %p208, %p209
      %p211 = pneg %p210
      // Predicated region
      $region33: #{tpu_custom_call.1} parent=5 // pred_check
        _
      $region34: #{tpu_custom_call.1} parent=5 // pred_check_branch
        %213 = sbr.rel (%p210) target = $region36
      $region35: #{tpu_custom_call.1} parent=5 // pred_region
        %s214 = ssub.s32 %s18, 1
        %s215 = sand.u32 %s31, 1
        %s216 = scalar_lea.sflag [#allocation3], %s215
        %s217 = sand.u32 %s31, 1
        %s218 = smul.addr %s217, 64
        %s219 = scalar_lea.vmem [#allocation2], %s218
        // Predicated region
        $region37: #{tpu_custom_call.1} parent=35 // pred_check
          %p220 = pneg %p44
        $region38: #{tpu_custom_call.1} parent=35 // pred_check_branch
          %222 = sbr.rel (%p220) target = $region40
        $region39: #{tpu_custom_call.1} parent=35 // pred_region
          %223 = dma.done %s216, 1024
        $region40: #{tpu_custom_call.1} parent=35 // pred_fallthru
          _
        %s224 = sand.u32 %s31, 1
        %s225 = scalar_lea.sflag [#allocation3], %s224
        %s226 = sand.u32 %s31, 1
        %s227 = smul.addr %s226, 64
        %s228 = scalar_lea.vmem [#allocation2], %s227
        %p229 = pneg %p44
        %p230 = pneg %p41
        %p231 = pneg %p65
        %p232 = pneg %p62
        %p233 = pneg %p86
        %p234 = pneg %p83
        %p235 = pneg %p107
        %p236 = pneg %p104
        %p237 = pneg %p133
        %p238 = pneg %p130
        %s239 = sand.u32 %s120, 1
        %s240 = scalar_lea.sflag [#allocation4], %s239
        %s241 = sand.u32 %s120, 1
        %s242 = smul.addr %s241, 8
        %s243 = scalar_lea.vmem [#allocation5], %s242
        %p244 = pneg %p159
        %p245 = pneg %p156
        %p246 = scmp.lt.s32.totalorder %s23, 1
        %s247 = scalar_select %p246, %s23, 1
        %s248 = smul.addr %s247, 8
        %s249 = scalar_lea.vmem %s5, %s248
        %s250 = smul.u32 8, %s23
        %p251 = scmp.lt.s32.totalorder %s23, 1
        %s252 = scalar_select %p251, %s23, 1
        %s253 = smul.addr %s252, 8
        %s254 = scalar_lea.vmem %s5, %s253
        %v255 = vld [vmem:[%s219] sm:$0xff]
        %v256 = vld [vmem:[%s219 + $0x8] sm:$0xff]
        %v257 = vld [vmem:[%s219 + $0x10] sm:$0xff]
        %v258 = vld [vmem:[%s219 + $0x18] sm:$0xff]
        %v259 = vld [vmem:[%s219 + $0x20] sm:$0xff]
        %v260 = vld [vmem:[%s219 + $0x28] sm:$0xff]
        %v261 = vld [vmem:[%s219 + $0x30] sm:$0xff]
        %v262 = vld [vmem:[%s219 + $0x38] sm:$0xff]
        %v263 = vld [vmem:[%s1] sm:$0xff]
        %v264 = vld [vmem:[%s1 + $0x8] sm:$0xff]
        %v265 = vld [vmem:[%s1 + $0x10] sm:$0xff]
        %v266 = vld [vmem:[%s1 + $0x18] sm:$0xff]
        %v267 = vld [vmem:[%s2] sm:$0x1]
        %v269 = vlaneseq
        %v270 = vshrl.u32 %v269, 7
        %v271 = vsub.s32 0, %v270
        %v272 = vrot.slane %v267, %v271
        %vm274 = vcmask 261120
        %v276 = vsel %vm274, %v255, 0
        %v279 = vsel %vm274, %v256, 0
        %v282 = vsel %vm274, %v257, 0
        %v285 = vsel %vm274, %v258, 0
        %v288 = vsel %vm274, %v259, 0
        %v291 = vsel %vm274, %v260, 0
        %v294 = vsel %vm274, %v261, 0
        %v297 = vsel %vm274, %v262, 0
        %299 = vmatprep.subr.mxu0 0.0
        %300 = vmatpush1.msra.mxu0 0.0
        %301 = vmatprep.subr.mxu0 0.0
        %302 = vmatpush1.msra.mxu0 0.0
        %303 = vmatprep.subr.mxu0 0.0
        %304 = vmatpush1.msra.mxu0 0.0
        %305 = vmatprep.subr.mxu0 0.0
        %306 = vmatpush1.msra.mxu0 0.0
        %307 = vmatprep.subr.mxu0 0.0
        %308 = vmatpush1.msra.mxu0 0.0
        %309 = vmatprep.subr.mxu0 0.0
        %310 = vmatpush1.msra.mxu0 0.0
        %311 = vmatprep.subr.mxu0 0.0
        %312 = vmatpush1.msra.mxu0 0.0
        %313 = vmatprep.subr.mxu0 0.0
        %314 = vmatpush1.msra.mxu0 0.0
        %315 = vmatprep.subr.mxu0 0.0
        %316 = vmatpush1.msra.mxu0 0.0
        %317 = vmatprep.subr.mxu0 0.0
        %318 = vmatpush1.msra.mxu0 0.0
        %319 = vmatprep.subr.mxu0 0.0
        %320 = vmatpush1.msra.mxu0 0.0
        %321 = vmatprep.subr.mxu0 0.0
        %322 = vmatpush1.msra.mxu0 0.0
        %323 = vmatprep.subr.mxu0 0.0
        %324 = vmatpush1.msra.mxu0 %v266
        %325 = vmatprep.subr.mxu0 0.0
        %326 = vmatpush1.msra.mxu0 %v265
        %327 = vmatprep.subr.mxu0 0.0
        %328 = vmatpush1.msra.mxu0 %v264
        %329 = vmatprep.subr.mxu0 0.0
        %330 = vmatpush1.msra.mxu0 %v263
        %331 = vmatprep.subr.mxu0 0.0
        %332 = vmatpush2.msra.mxu0 0.0
        %333 = vmatprep.subr.mxu0 0.0
        %334 = vmatpush2.msra.mxu0 0.0
        %335 = vmatprep.subr.mxu0 0.0
        %336 = vmatpush2.msra.mxu0 0.0
        %337 = vmatprep.subr.mxu0 0.0
        %338 = vmatpush2.msra.mxu0 0.0
        %339 = vmatprep.subr.mxu0 0.0
        %340 = vmatpush2.msra.mxu0 0.0
        %341 = vmatprep.subr.mxu0 0.0
        %342 = vmatpush2.msra.mxu0 0.0
        %343 = vmatprep.subr.mxu0 0.0
        %344 = vmatpush2.msra.mxu0 0.0
        %345 = vmatprep.subr.mxu0 0.0
        %346 = vmatpush2.msra.mxu0 0.0
        %347 = vmatprep.subr.mxu0 0.0
        %348 = vmatpush2.msra.mxu0 0.0
        %349 = vmatprep.subr.mxu0 0.0
        %350 = vmatpush2.msra.mxu0 0.0
        %351 = vmatprep.subr.mxu0 0.0
        %352 = vmatpush2.msra.mxu0 0.0
        %353 = vmatprep.subr.mxu0 0.0
        %354 = vmatpush2.msra.mxu0 0.0
        %355 = vmatprep.subr.mxu0 0.0
        %356 = vmatpush2.msra.mxu0 0.0
        %357 = vmatprep.subr.mxu0 0.0
        %358 = vmatpush2.msra.mxu0 0.0
        %359 = vmatprep.subr.mxu0 0.0
        %360 = vmatpush2.msra.mxu0 0.0
        %361 = vmatprep.subr.mxu0 0.0
        %362 = vmatpush2.msra.mxu0 0.0
        %363 = vmatprep.mubr.f32.mxu0 0.0
        %364 = vmatmul.mubr.f32.gmra.mxu0 %v276
        %v365 = vpop.f32.mrf.mxu0
        %v366 = vadd.f32 %v272, %v365
        %v367 = vpop.f32.mrf.mxu0
        %368 = vmatprep.mubr.f32.mxu0 0.0
        %369 = vmatmul.mubr.f32.gmra.mxu0 %v279
        %v370 = vpop.f32.mrf.mxu0
        %v371 = vadd.f32 %v272, %v370
        %v372 = vpop.f32.mrf.mxu0
        %373 = vmatprep.mubr.f32.mxu0 0.0
        %374 = vmatmul.mubr.f32.gmra.mxu0 %v282
        %v375 = vpop.f32.mrf.mxu0
        %v376 = vadd.f32 %v272, %v375
        %v377 = vpop.f32.mrf.mxu0
        %378 = vmatprep.mubr.f32.mxu0 0.0
        %379 = vmatmul.mubr.f32.gmra.mxu0 %v285
        %v380 = vpop.f32.mrf.mxu0
        %v381 = vadd.f32 %v272, %v380
        %v382 = vpop.f32.mrf.mxu0
        %383 = vmatprep.mubr.f32.mxu0 0.0
        %384 = vmatmul.mubr.f32.gmra.mxu0 %v288
        %v385 = vpop.f32.mrf.mxu0
        %v386 = vadd.f32 %v272, %v385
        %v387 = vpop.f32.mrf.mxu0
        %388 = vmatprep.mubr.f32.mxu0 0.0
        %389 = vmatmul.mubr.f32.gmra.mxu0 %v291
        %v390 = vpop.f32.mrf.mxu0
        %v391 = vadd.f32 %v272, %v390
        %v392 = vpop.f32.mrf.mxu0
        %393 = vmatprep.mubr.f32.mxu0 0.0
        %394 = vmatmul.mubr.f32.gmra.mxu0 %v294
        %v395 = vpop.f32.mrf.mxu0
        %v396 = vadd.f32 %v272, %v395
        %v397 = vpop.f32.mrf.mxu0
        %398 = vmatprep.mubr.f32.mxu0 0.0
        %399 = vmatmul.mubr.f32.gmra.mxu0 %v297
        %v400 = vpop.f32.mrf.mxu0
        %v401 = vadd.f32 %v272, %v400
        %v402 = vpop.f32.mrf.mxu0
        %403 = vdwg.mxu0
        %v404 = vtanh.pop %v366
        %v405 = vtanh.pop %v371
        %v406 = vtanh.pop %v376
        %v407 = vtanh.pop %v381
        %v408 = vtanh.pop %v386
        %v409 = vtanh.pop %v391
        %v410 = vtanh.pop %v396
        %v411 = vtanh.pop %v401
        %v412 = vld [vmem:[%s3] sm:$0x1]
        %v414 = vlaneseq
        %v415 = vshrl.u32 %v414, 7
        %v416 = vsub.s32 0, %v415
        %v417 = vrot.slane %v412, %v416
        %v419 = vmul.f32 %v404, %v417
        %v420 = vmul.f32 %v405, %v417
        %v421 = vmul.f32 %v406, %v417
        %v422 = vmul.f32 %v407, %v417
        %v423 = vmul.f32 %v408, %v417
        %v424 = vmul.f32 %v409, %v417
        %v425 = vmul.f32 %v410, %v417
        %v426 = vmul.f32 %v411, %v417
        %vm427 = vcmask 130048
        %v428 = vsel %vm427, %v419, 0.0
        %429 = vadd.xlane.f32.xlu0 %v428
        %v430 = vpop.xlane.xlu0 %429
        %v431 = vsel %vm427, %v420, 0.0
        %432 = vadd.xlane.f32.xlu0 %v431
        %v433 = vpop.xlane.xlu0 %432
        %v434 = vsel %vm427, %v421, 0.0
        %435 = vadd.xlane.f32.xlu0 %v434
        %v436 = vpop.xlane.xlu0 %435
        %v437 = vsel %vm427, %v422, 0.0
        %438 = vadd.xlane.f32.xlu0 %v437
        %v439 = vpop.xlane.xlu0 %438
        %v440 = vsel %vm427, %v423, 0.0
        %441 = vadd.xlane.f32.xlu0 %v440
        %v442 = vpop.xlane.xlu0 %441
        %v443 = vsel %vm427, %v424, 0.0
        %444 = vadd.xlane.f32.xlu0 %v443
        %v445 = vpop.xlane.xlu0 %444
        %v446 = vsel %vm427, %v425, 0.0
        %447 = vadd.xlane.f32.xlu0 %v446
        %v448 = vpop.xlane.xlu0 %447
        %v449 = vsel %vm427, %v426, 0.0
        %450 = vadd.xlane.f32.xlu0 %v449
        %v451 = vpop.xlane.xlu0 %450
        %v460 = vlaneseq
        %v461 = vand.u32 %v460, 127
        %v462 = vlaneseq
        %v463 = vshrl.u32 %v462, 7
        %v464 = vsub.s32 %v461, %v463
        %v465 = vrot.slane %v430, %v464
        %v466 = vlaneseq
        %v467 = vshrl.u32 %v466, 7
        %v468 = vsub.s32 %v461, %v467
        %v469 = vrot.slane %v433, %v468
        %v470 = vlaneseq
        %v471 = vshrl.u32 %v470, 7
        %v472 = vsub.s32 %v461, %v471
        %v473 = vrot.slane %v436, %v472
        %v474 = vlaneseq
        %v475 = vshrl.u32 %v474, 7
        %v476 = vsub.s32 %v461, %v475
        %v477 = vrot.slane %v439, %v476
        %v478 = vlaneseq
        %v479 = vshrl.u32 %v478, 7
        %v480 = vsub.s32 %v461, %v479
        %v481 = vrot.slane %v442, %v480
        %v482 = vlaneseq
        %v483 = vshrl.u32 %v482, 7
        %v484 = vsub.s32 %v461, %v483
        %v485 = vrot.slane %v445, %v484
        %v486 = vlaneseq
        %v487 = vshrl.u32 %v486, 7
        %v488 = vsub.s32 %v461, %v487
        %v489 = vrot.slane %v448, %v488
        %v490 = vlaneseq
        %v491 = vshrl.u32 %v490, 7
        %v492 = vsub.s32 %v461, %v491
        %v493 = vrot.slane %v451, %v492
        %vm494 = vcmask 1041409
        %v495 = vsel %vm494, %v469, %v465
        %vm496 = vcmask 1042434
        %v497 = vsel %vm496, %v473, %v495
        %vm498 = vcmask 1043459
        %v499 = vsel %vm498, %v477, %v497
        %vm500 = vcmask 1044484
        %v501 = vsel %vm500, %v481, %v499
        %vm502 = vcmask 1045509
        %v503 = vsel %vm502, %v485, %v501
        %vm504 = vcmask 1046534
        %v505 = vsel %vm504, %v489, %v503
        %vm506 = vcmask 1047559
        %v507 = vsel %vm506, %v493, %v505
        %vm509 = vcmask 64512
        %v510 = vsel %vm509, %v507, -inf
        %511 = vmax.xlane.f32.xlu0 %v510
        %v512 = vpop.xlane.xlu0 %511
        %v514 = vlaneseq
        %v515 = vshrl.u32 %v514, 7
        %v516 = vsub.s32 0, %v515
        %v517 = vrot.slane %v512, %v516
        %v518 = vlaneseq
        %v519 = vshrl.u32 %v518, 7
        %v520 = vsub.s32 1, %v519
        %v521 = vrot.slane %v512, %v520
        %v522 = vlaneseq
        %v523 = vshrl.u32 %v522, 7
        %v524 = vsub.s32 2, %v523
        %v525 = vrot.slane %v512, %v524
        %v526 = vlaneseq
        %v527 = vshrl.u32 %v526, 7
        %v528 = vsub.s32 3, %v527
        %v529 = vrot.slane %v512, %v528
        %v530 = vlaneseq
        %v531 = vshrl.u32 %v530, 7
        %v532 = vsub.s32 4, %v531
        %v533 = vrot.slane %v512, %v532
        %v534 = vlaneseq
        %v535 = vshrl.u32 %v534, 7
        %v536 = vsub.s32 5, %v535
        %v537 = vrot.slane %v512, %v536
        %v538 = vlaneseq
        %v539 = vshrl.u32 %v538, 7
        %v540 = vsub.s32 6, %v539
        %v541 = vrot.slane %v512, %v540
        %v542 = vlaneseq
        %v543 = vshrl.u32 %v542, 7
        %v544 = vsub.s32 7, %v543
        %v545 = vrot.slane %v512, %v544
        %v554 = vsub.f32 %v430, %v517
        %v555 = vsub.f32 %v433, %v521
        %v556 = vsub.f32 %v436, %v525
        %v557 = vsub.f32 %v439, %v529
        %v558 = vsub.f32 %v442, %v533
        %v559 = vsub.f32 %v445, %v537
        %v560 = vsub.f32 %v448, %v541
        %v561 = vsub.f32 %v451, %v545
        %v562 = vmul.f32 %v554, 1.442695
        %v563 = vpow.pop %v562
        %v564 = vmul.f32 %v555, 1.442695
        %v565 = vpow.pop %v564
        %v566 = vmul.f32 %v556, 1.442695
        %v567 = vpow.pop %v566
        %v568 = vmul.f32 %v557, 1.442695
        %v569 = vpow.pop %v568
        %v570 = vmul.f32 %v558, 1.442695
        %v571 = vpow.pop %v570
        %v572 = vmul.f32 %v559, 1.442695
        %v573 = vpow.pop %v572
        %v574 = vmul.f32 %v560, 1.442695
        %v575 = vpow.pop %v574
        %v576 = vmul.f32 %v561, 1.442695
        %v577 = vpow.pop %v576
        %586 = vset.pattern.permute.xlu0 0
        %587 = vperm.xlu0 %586, %v563
        %v588 = vpop.permute.xlu0 %587
        %589 = vset.pattern.permute.xlu0 0
        %590 = vperm.xlu0 %589, %v565
        %v591 = vpop.permute.xlu0 %590
        %592 = vset.pattern.permute.xlu0 0
        %593 = vperm.xlu0 %592, %v567
        %v594 = vpop.permute.xlu0 %593
        %595 = vset.pattern.permute.xlu0 0
        %596 = vperm.xlu0 %595, %v569
        %v597 = vpop.permute.xlu0 %596
        %598 = vset.pattern.permute.xlu0 0
        %599 = vperm.xlu0 %598, %v571
        %v600 = vpop.permute.xlu0 %599
        %601 = vset.pattern.permute.xlu0 0
        %602 = vperm.xlu0 %601, %v573
        %v603 = vpop.permute.xlu0 %602
        %604 = vset.pattern.permute.xlu0 0
        %605 = vperm.xlu0 %604, %v575
        %v606 = vpop.permute.xlu0 %605
        %607 = vset.pattern.permute.xlu0 0
        %608 = vperm.xlu0 %607, %v577
        %v609 = vpop.permute.xlu0 %608
        %v610 = vlaneseq
        %v611 = vshrl.u32 %v610, 7
        %v612 = vsub.s32 %v461, %v611
        %v613 = vrot.slane %v588, %v612
        %v614 = vlaneseq
        %v615 = vshrl.u32 %v614, 7
        %v616 = vsub.s32 %v461, %v615
        %v617 = vrot.slane %v591, %v616
        %v618 = vlaneseq
        %v619 = vshrl.u32 %v618, 7
        %v620 = vsub.s32 %v461, %v619
        %v621 = vrot.slane %v594, %v620
        %v622 = vlaneseq
        %v623 = vshrl.u32 %v622, 7
        %v624 = vsub.s32 %v461, %v623
        %v625 = vrot.slane %v597, %v624
        %v626 = vlaneseq
        %v627 = vshrl.u32 %v626, 7
        %v628 = vsub.s32 %v461, %v627
        %v629 = vrot.slane %v600, %v628
        %v630 = vlaneseq
        %v631 = vshrl.u32 %v630, 7
        %v632 = vsub.s32 %v461, %v631
        %v633 = vrot.slane %v603, %v632
        %v634 = vlaneseq
        %v635 = vshrl.u32 %v634, 7
        %v636 = vsub.s32 %v461, %v635
        %v637 = vrot.slane %v606, %v636
        %v638 = vlaneseq
        %v639 = vshrl.u32 %v638, 7
        %v640 = vsub.s32 %v461, %v639
        %v641 = vrot.slane %v609, %v640
        %v642 = vsel %vm494, %v617, %v613
        %v643 = vsel %vm496, %v621, %v642
        %v644 = vsel %vm498, %v625, %v643
        %v645 = vsel %vm500, %v629, %v644
        %v646 = vsel %vm502, %v633, %v645
        %v647 = vsel %vm504, %v637, %v646
        %v648 = vsel %vm506, %v641, %v647
        %v650 = vsel %vm509, %v648, 0.0
        %651 = vadd.xlane.f32.xlu0 %v650
        %v652 = vpop.xlane.xlu0 %651
        %v654 = vlaneseq
        %v655 = vshrl.u32 %v654, 7
        %v656 = vsub.s32 0, %v655
        %v657 = vrot.slane %v652, %v656
        %v658 = vlaneseq
        %v659 = vshrl.u32 %v658, 7
        %v660 = vsub.s32 1, %v659
        %v661 = vrot.slane %v652, %v660
        %v662 = vlaneseq
        %v663 = vshrl.u32 %v662, 7
        %v664 = vsub.s32 2, %v663
        %v665 = vrot.slane %v652, %v664
        %v666 = vlaneseq
        %v667 = vshrl.u32 %v666, 7
        %v668 = vsub.s32 3, %v667
        %v669 = vrot.slane %v652, %v668
        %v670 = vlaneseq
        %v671 = vshrl.u32 %v670, 7
        %v672 = vsub.s32 4, %v671
        %v673 = vrot.slane %v652, %v672
        %v674 = vlaneseq
        %v675 = vshrl.u32 %v674, 7
        %v676 = vsub.s32 5, %v675
        %v677 = vrot.slane %v652, %v676
        %v678 = vlaneseq
        %v679 = vshrl.u32 %v678, 7
        %v680 = vsub.s32 6, %v679
        %v681 = vrot.slane %v652, %v680
        %v682 = vlaneseq
        %v683 = vshrl.u32 %v682, 7
        %v684 = vsub.s32 7, %v683
        %v685 = vrot.slane %v652, %v684
        %v694 = vrcp.pop %v657
        %v695 = vmul.f32 %v563, %v694
        %v696 = vrcp.pop %v661
        %v697 = vmul.f32 %v565, %v696
        %v698 = vrcp.pop %v665
        %v699 = vmul.f32 %v567, %v698
        %v700 = vrcp.pop %v669
        %v701 = vmul.f32 %v569, %v700
        %v702 = vrcp.pop %v673
        %v703 = vmul.f32 %v571, %v702
        %v704 = vrcp.pop %v677
        %v705 = vmul.f32 %v573, %v704
        %v706 = vrcp.pop %v681
        %v707 = vmul.f32 %v575, %v706
        %v708 = vrcp.pop %v685
        %v709 = vmul.f32 %v577, %v708
        %718 = vset.pattern.permute.xlu0 0
        %719 = vperm.xlu0 %718, %v695
        %v720 = vpop.permute.xlu0 %719
        %721 = vset.pattern.permute.xlu0 0
        %722 = vperm.xlu0 %721, %v697
        %v723 = vpop.permute.xlu0 %722
        %724 = vset.pattern.permute.xlu0 0
        %725 = vperm.xlu0 %724, %v699
        %v726 = vpop.permute.xlu0 %725
        %727 = vset.pattern.permute.xlu0 0
        %728 = vperm.xlu0 %727, %v701
        %v729 = vpop.permute.xlu0 %728
        %730 = vset.pattern.permute.xlu0 0
        %731 = vperm.xlu0 %730, %v703
        %v732 = vpop.permute.xlu0 %731
        %733 = vset.pattern.permute.xlu0 0
        %734 = vperm.xlu0 %733, %v705
        %v735 = vpop.permute.xlu0 %734
        %736 = vset.pattern.permute.xlu0 0
        %737 = vperm.xlu0 %736, %v707
        %v738 = vpop.permute.xlu0 %737
        %739 = vset.pattern.permute.xlu0 0
        %740 = vperm.xlu0 %739, %v709
        %v741 = vpop.permute.xlu0 %740
        %v742 = vlaneseq
        %v743 = vshrl.u32 %v742, 7
        %v744 = vsub.s32 %v461, %v743
        %v745 = vrot.slane %v720, %v744
        %v746 = vlaneseq
        %v747 = vshrl.u32 %v746, 7
        %v748 = vsub.s32 %v461, %v747
        %v749 = vrot.slane %v723, %v748
        %v750 = vlaneseq
        %v751 = vshrl.u32 %v750, 7
        %v752 = vsub.s32 %v461, %v751
        %v753 = vrot.slane %v726, %v752
        %v754 = vlaneseq
        %v755 = vshrl.u32 %v754, 7
        %v756 = vsub.s32 %v461, %v755
        %v757 = vrot.slane %v729, %v756
        %v758 = vlaneseq
        %v759 = vshrl.u32 %v758, 7
        %v760 = vsub.s32 %v461, %v759
        %v761 = vrot.slane %v732, %v760
        %v762 = vlaneseq
        %v763 = vshrl.u32 %v762, 7
        %v764 = vsub.s32 %v461, %v763
        %v765 = vrot.slane %v735, %v764
        %v766 = vlaneseq
        %v767 = vshrl.u32 %v766, 7
        %v768 = vsub.s32 %v461, %v767
        %v769 = vrot.slane %v738, %v768
        %v770 = vlaneseq
        %v771 = vshrl.u32 %v770, 7
        %v772 = vsub.s32 %v461, %v771
        %v773 = vrot.slane %v741, %v772
        %v774 = vsel %vm494, %v749, %v745
        %v775 = vsel %vm496, %v753, %v774
        %v776 = vsel %vm498, %v757, %v775
        %v777 = vsel %vm500, %v761, %v776
        %v778 = vsel %vm502, %v765, %v777
        %v779 = vsel %vm504, %v769, %v778
        %v780 = vsel %vm506, %v773, %v779
        %782 = vst.msk [vmem:[%s254] sm:$0xff] %vm509, %v780
        %v791 = vmul.f32 %v720, %v255
        %v792 = vmul.f32 %v723, %v256
        %v793 = vmul.f32 %v726, %v257
        %v794 = vmul.f32 %v729, %v258
        %v795 = vmul.f32 %v732, %v259
        %v796 = vmul.f32 %v735, %v260
        %v797 = vmul.f32 %v738, %v261
        %v798 = vmul.f32 %v741, %v262
        %v799 = vsel %vm274, %v791, 0.0
        %v800 = vrot.slane %v799, 4
        %v801 = vadd.f32 %v799, %v800
        %v802 = vrot.slane %v801, 2
        %v803 = vadd.f32 %v801, %v802
        %v804 = vrot.slane %v803, 1
        %v805 = vadd.f32 %v803, %v804
        %v806 = vsel %vm274, %v792, 0.0
        %v807 = vrot.slane %v806, 4
        %v808 = vadd.f32 %v806, %v807
        %v809 = vrot.slane %v808, 2
        %v810 = vadd.f32 %v808, %v809
        %v811 = vrot.slane %v810, 1
        %v812 = vadd.f32 %v810, %v811
        %v813 = vsel %vm274, %v793, 0.0
        %v814 = vrot.slane %v813, 4
        %v815 = vadd.f32 %v813, %v814
        %v816 = vrot.slane %v815, 2
        %v817 = vadd.f32 %v815, %v816
        %v818 = vrot.slane %v817, 1
        %v819 = vadd.f32 %v817, %v818
        %v820 = vsel %vm274, %v794, 0.0
        %v821 = vrot.slane %v820, 4
        %v822 = vadd.f32 %v820, %v821
        %v823 = vrot.slane %v822, 2
        %v824 = vadd.f32 %v822, %v823
        %v825 = vrot.slane %v824, 1
        %v826 = vadd.f32 %v824, %v825
        %v827 = vsel %vm274, %v795, 0.0
        %v828 = vrot.slane %v827, 4
        %v829 = vadd.f32 %v827, %v828
        %v830 = vrot.slane %v829, 2
        %v831 = vadd.f32 %v829, %v830
        %v832 = vrot.slane %v831, 1
        %v833 = vadd.f32 %v831, %v832
        %v834 = vsel %vm274, %v796, 0.0
        %v835 = vrot.slane %v834, 4
        %v836 = vadd.f32 %v834, %v835
        %v837 = vrot.slane %v836, 2
        %v838 = vadd.f32 %v836, %v837
        %v839 = vrot.slane %v838, 1
        %v840 = vadd.f32 %v838, %v839
        %v841 = vsel %vm274, %v797, 0.0
        %v842 = vrot.slane %v841, 4
        %v843 = vadd.f32 %v841, %v842
        %v844 = vrot.slane %v843, 2
        %v845 = vadd.f32 %v843, %v844
        %v846 = vrot.slane %v845, 1
        %v847 = vadd.f32 %v845, %v846
        %v848 = vsel %vm274, %v798, 0.0
        %v849 = vrot.slane %v848, 4
        %v850 = vadd.f32 %v848, %v849
        %v851 = vrot.slane %v850, 2
        %v852 = vadd.f32 %v850, %v851
        %v853 = vrot.slane %v852, 1
        %v854 = vadd.f32 %v852, %v853
        %v863 = vsel %vm494, %v812, %v805
        %v864 = vsel %vm496, %v819, %v863
        %v865 = vsel %vm498, %v826, %v864
        %v866 = vsel %vm500, %v833, %v865
        %v867 = vsel %vm502, %v840, %v866
        %v868 = vsel %vm504, %v847, %v867
        %v869 = vsel %vm506, %v854, %v868
        %871 = vst.msk [vmem:[%s243] sm:$0xff] %vm274, %v869
        %s872 = sand.u32 %s120, 1
        %s873 = scalar_lea.sflag [#allocation4], %s872
        %s874 = sand.u32 %s120, 1
        %s875 = smul.addr %s874, 8
        %s876 = scalar_lea.vmem [#allocation5], %s875
        %p877 = scmp.lt.s32.totalorder %s23, 1
        %s878 = scalar_select %p877, %s23, 1
        %s879 = smul.addr %s878, 8
        %s880 = scalar_lea.vmem %s5, %s879
        // Predicated region
        $region41: #{tpu_custom_call.1} parent=35 // pred_check
          %p881 = pneg %p130
        $region42: #{tpu_custom_call.1} parent=35 // pred_check_branch
          %883 = sbr.rel (%p881) target = $region44
        $region43: #{tpu_custom_call.1} parent=35 // pred_region
          %s885 = ssub.s32 128, 128
          %886 = vsyncadd %s873, %s885
          %s887 = smul.addr %s23, 128
          %s888 = scalar_lea.hbm %s4, %s887
          %s890 = sshll.u32 %s876, 4
          %s891 = int_to_ptr.vmem [resolvable:$true] %s890
          %893 = dma.vmem_to_hbm [thread:$0]  %s891, 128, %s888, %s873
        $region44: #{tpu_custom_call.1} parent=35 // pred_fallthru
          _
        // Predicated region
        $region45: #{tpu_custom_call.1} parent=35 // pred_check
          %p894 = pneg %p156
        $region46: #{tpu_custom_call.1} parent=35 // pred_check_branch
          %896 = sbr.rel (%p894) target = $region48
        $region47: #{tpu_custom_call.1} parent=35 // pred_region
          _
        $region48: #{tpu_custom_call.1} parent=35 // pred_fallthru
          _
      $region36: #{tpu_custom_call.1} parent=5 // pred_fallthru
        _
      %p897 = scmp.le.s32.totalorder 2, %s18
      // Predicated region
      $region49: #{tpu_custom_call.1} parent=5 // pred_check
        %p898 = pneg %p897
      $region50: #{tpu_custom_call.1} parent=5 // pred_check_branch
        %900 = sbr.rel (%p898) target = $region52
      $region51: #{tpu_custom_call.1} parent=5 // pred_region
        %s901 = ssub.s32 %s18, 2
        // Predicated region
        $region53: #{tpu_custom_call.1} parent=51 // pred_check
          %p902 = pneg %p136
        $region54: #{tpu_custom_call.1} parent=51 // pred_check_branch
          %904 = sbr.rel (%p902) target = $region56
        $region55: #{tpu_custom_call.1} parent=51 // pred_region
          %s905 = sand.u32 %s121, 1
          %s906 = scalar_lea.sflag [#allocation4], %s905
          %s907 = sand.u32 %s121, 1
          %s908 = smul.addr %s907, 8
          %s909 = scalar_lea.vmem [#allocation5], %s908
          %910 = dma.done %s906, 128
        $region56: #{tpu_custom_call.1} parent=51 // pred_fallthru
          _
        // Predicated region
        $region57: #{tpu_custom_call.1} parent=51 // pred_check
          %p911 = pneg %p162
        $region58: #{tpu_custom_call.1} parent=51 // pred_check_branch
          %913 = sbr.rel (%p911) target = $region60
        $region59: #{tpu_custom_call.1} parent=51 // pred_region
          %p914 = scmp.lt.s32.totalorder %s24, 1
          %s915 = scalar_select %p914, %s24, 1
          %s916 = smul.addr %s915, 8
          %s917 = scalar_lea.vmem %s5, %s916
        $region60: #{tpu_custom_call.1} parent=51 // pred_fallthru
          _
      $region52: #{tpu_custom_call.1} parent=5 // pred_fallthru
        _
    $region6: #{tpu_custom_call.1} parent=1 // loop_footer
      %s22 = sadd.s32 1, %s18
    $region7: #{tpu_custom_call.1} parent=1 // loop_footer_branch
      %17 = sbr.rel target = $region3
    $region8: #{tpu_custom_call.1} parent=1 // loop_exit
      _
    %918 = vsyncpa [#allocation3], 1
    %s919 = scalar_lea.sflag [#allocation3], 1
    %920 = vsyncpa %s919, 1
    %921 = vsyncpa [#allocation4], 1
    %s922 = scalar_lea.sflag [#allocation4], 1
    %923 = vsyncpa %s922, 1

</llo_original>
